<compile_context>
chip_gen: v6e
topology: v6e:2x2x1
jax: 0.10.0
libtpu: 0.0.40
codegen_flags: <defaults>
</compile_context>

<pallas_src>
import jax
import jax.numpy as jnp
from jax.experimental import pallas as pl
from jax.experimental.pallas import tpu as pltpu


# ---------------------------------------------------------------------------
# Detect pltpu.roll's rotation convention once (tiny probe kernel) so the
# conv row-shifts are provably in the right direction on this backend.
# ---------------------------------------------------------------------------
def _roll_matches_numpy():
    def probe(x_ref, o_ref):
        o_ref[...] = pltpu.roll(x_ref[...], 1, 0)

    x = jnp.broadcast_to(jnp.arange(8, dtype=jnp.float32)[:, None], (8, 128))
    out = pl.pallas_call(
        probe, out_shape=jax.ShapeDtypeStruct((8, 128), jnp.float32))(x)
    # np.roll convention: result[1] = x[0]  ->  0.0
    return bool(float(out[1, 0]) == 0.0)


_ROLL_MATCHES_NUMPY = _roll_matches_numpy()


# ---------------------------------------------------------------------------
# Fused ResidualGroup kernel
# ---------------------------------------------------------------------------
def _make_group_kernel(H, W, C, Cr, B, G, shift_prev, shift_next):
    WC = W * C
    R = G * H                     # matmul M: G images stacked along rows

    def kernel(x_ref,                       # (R, WC) f32 — G images, lane-dense
               wb1_ref, b1_ref,             # (B, 3, WC, WC) bf16, (B, 1, WC) f32
               wb2_ref, b2_ref,             # conv2 band / bias
               caw1_ref, cab1_ref,          # (B, WC, Cr) f32 (pool-folded), (B, 1, Cr)
               caw2_ref, cab2_ref,          # (B, Cr, WC) f32 (expand-folded), (B, 1, WC)
               wbt_ref, bt_ref,             # (3, WC, WC) bf16, (1, WC) f32
               o_ref):                      # (R, WC) f32
        # Per-image H-boundary masks for the rolled conv taps (built once).
        row = jax.lax.broadcasted_iota(jnp.int32, (R, 1), 0) % H
        m_top = (row != 0).astype(jnp.float32)        # kill wrap at image row 0
        m_bot = (row != H - 1).astype(jnp.float32)    # kill wrap at image row H-1

        x0 = x_ref[...]

        def conv3x3(v, w_tap, bias_row):
            # 3 deep-K (K = W*C) MXU matmuls, one per dy tap; dx taps and the
            # 'same' W-padding are folded into the banded weights.  The dy row
            # shift is applied to the matmul RESULT with an XLU rotate plus a
            # boundary mask, so there is no pad scratch, no staging copy and
            # no misaligned load/store anywhere in the conv.
            vb = v.astype(jnp.bfloat16)               # bf16 MXU operand, f32 accum
            p0 = jnp.dot(vb, w_tap(0), preferred_element_type=jnp.float32)
            p1 = jnp.dot(vb, w_tap(1), preferred_element_type=jnp.float32)
            p2 = jnp.dot(vb, w_tap(2), preferred_element_type=jnp.float32)
            return (p1 + bias_row
                    + m_top * pltpu.roll(p0, shift_prev, 0)
                    + m_bot * pltpu.roll(p2, shift_next, 0))

        res = x0
        for b in range(B):                  # RCAB blocks (B small & static)
            h = conv3x3(res, lambda dy: wb1_ref[b, dy], b1_ref[b])
            h = jnp.maximum(h, 0.0)                                     # ReLU
            h = conv3x3(h, lambda dy: wb2_ref[b, dy], b2_ref[b])
            # Channel attention (avg-pool -> FC -> ReLU -> FC -> sigmoid ->
            # per-channel rescale) + block residual.  The pool / expand
            # constants are pre-folded into the FC weights, so per image it is
            # just 2 tiny matmuls + a sigmoid, all in f32.
            pieces = []
            for g in range(G):              # per-image, aligned (H, WC) chunks
                hg = h[g * H:(g + 1) * H]
                rs = jnp.sum(hg, axis=0, keepdims=True)                 # (1, WC)
                y = jnp.dot(rs, caw1_ref[b],
                            preferred_element_type=jnp.float32) + cab1_ref[b]
                y = jnp.maximum(y, 0.0)                                 # (1, Cr)
                y = jnp.dot(y, caw2_ref[b],
                            preferred_element_type=jnp.float32) + cab2_ref[b]
                s = jax.nn.sigmoid(y)                                   # (1, WC)
                pieces.append(hg * s + res[g * H:(g + 1) * H])
            res = jnp.concatenate(pieces, axis=0)                       # (R, WC)

        # Tail conv + outer group residual, still fused in the same kernel.
        t = conv3x3(res, lambda dy: wbt_ref[dy], bt_ref[...])
        o_ref[...] = t + x0

    return kernel


# ---------------------------------------------------------------------------
# Weight packing (wrapper-side, tiny plain-JAX glue)
# ---------------------------------------------------------------------------
def _banded_conv_weight(w, W):
    """(3,3,Cin,Cout) HWIO -> (3, W*Cin, W*Cout) width-direction block-Toeplitz.

    band[dy, p*Cin+ci, x*Cout+co] = w[dy, p-x+1, ci, co] when 0 <= p-x+1 <= 2,
    else 0 — the dx taps and the 'same' zero-padding along W are folded into
    the matmul contraction.
    """
    _, _, Cin, Cout = w.shape
    p = jnp.arange(W)[:, None]          # input column
    x = jnp.arange(W)[None, :]          # output column
    dx = p - x + 1
    valid = ((dx >= 0) & (dx <= 2)).astype(w.dtype)
    dx_c = jnp.clip(dx, 0, 2)
    wb = w[:, dx_c, :, :] * valid[None, :, :, None, None]   # (3, W, W, Cin, Cout)
    return wb.transpose(0, 1, 3, 2, 4).reshape(3, W * Cin, W * Cout)


def _tiled_bias(b, W):
    return jnp.tile(b, (W,)).reshape(1, W * b.shape[0])


def _pick_images_per_block(N, H, target_rows=256):
    """Largest divisor G of N with G*H <= target_rows, keeping grid >= 2."""
    best = 1
    for g in range(1, N + 1):
        if N % g != 0:
            continue
        if g * H > max(target_rows, H):
            continue
        if N >= 2 and N // g < 2:     # keep >= 2 grid steps so both v7x TCs work
            continue
        best = g
    return best


# ---------------------------------------------------------------------------
# Module forward: ResidualGroup (single fused pallas_call)
# ---------------------------------------------------------------------------
def residual_group_forward(x, params):
    """x: (N, H, W, C) NHWC float32."""
    N, H, W, C = x.shape
    rc = params["rcabs"]
    B = len(rc)
    Cr = rc[0]["ca_w1"].shape[-1]
    WC = W * C

    G = _pick_images_per_block(N, H)
    RB = G * H                      # rows (= matmul M) per grid step

    # Banded conv weights as bf16 MXU operands; biases stay f32.
    wb1 = jnp.stack([_banded_conv_weight(blk["conv1_w"], W) for blk in rc]
                    ).astype(jnp.bfloat16)
    wb2 = jnp.stack([_banded_conv_weight(blk["conv2_w"], W) for blk in rc]
                    ).astype(jnp.bfloat16)
    wbt = _banded_conv_weight(params["tail_w"], W).astype(jnp.bfloat16)
    b1 = jnp.stack([_tiled_bias(blk["conv1_b"], W) for blk in rc])
    b2 = jnp.stack([_tiled_bias(blk["conv2_b"], W) for blk in rc])
    bt = _tiled_bias(params["tail_b"], W)

    # Channel attention with the constant pool / expand matrices folded in
    # (exact: expand is pure channel replication, so it commutes with sigmoid).
    eye = jnp.eye(C, dtype=jnp.float32)
    pool = jnp.tile(eye, (W, 1)) / float(H * W)            # (WC, C)
    expand = jnp.tile(eye, (1, W))                         # (C, WC)
    caw1f = jnp.stack([pool @ blk["ca_w1"] for blk in rc])            # (B, WC, Cr)
    cab1 = jnp.stack([blk["ca_b1"].reshape(1, Cr) for blk in rc])     # (B, 1, Cr)
    caw2f = jnp.stack([blk["ca_w2"] @ expand for blk in rc])          # (B, Cr, WC)
    cab2f = jnp.stack([_tiled_bias(blk["ca_b2"], W) for blk in rc])   # (B, 1, WC)

    if _ROLL_MATCHES_NUMPY:
        shift_prev, shift_next = 1, RB - 1     # result[a] = p[a-1] / p[a+1]
    else:
        shift_prev, shift_next = RB - 1, 1

    x2 = x.reshape(N * H, WC)       # lane-dense view (free row-major reinterpret)

    kernel = _make_group_kernel(H, W, C, Cr, B, G, shift_prev, shift_next)
    out = pl.pallas_call(
        kernel,
        out_shape=jax.ShapeDtypeStruct((N * H, WC), jnp.float32),
        grid=(N // G,),
        in_specs=[
            pl.BlockSpec((RB, WC), lambda n: (n, 0)),             # x slab
            # Grid-invariant weights: DMA'd once and resident in VMEM.
            # TODO(synk): pipeline_mode=pl.Buffered(1) here to avoid
            #   double-buffering the resident weight set at larger B / n_feat.
            pl.BlockSpec((B, 3, WC, WC), lambda n: (0, 0, 0, 0)),  # conv1 band
            pl.BlockSpec((B, 1, WC), lambda n: (0, 0, 0)),         # conv1 bias
            pl.BlockSpec((B, 3, WC, WC), lambda n: (0, 0, 0, 0)),  # conv2 band
            pl.BlockSpec((B, 1, WC), lambda n: (0, 0, 0)),         # conv2 bias
            pl.BlockSpec((B, WC, Cr), lambda n: (0, 0, 0)),        # CA fc1 (pool-folded)
            pl.BlockSpec((B, 1, Cr), lambda n: (0, 0, 0)),         # CA b1
            pl.BlockSpec((B, Cr, WC), lambda n: (0, 0, 0)),        # CA fc2 (expand-folded)
            pl.BlockSpec((B, 1, WC), lambda n: (0, 0, 0)),         # CA b2 (lane-tiled)
            pl.BlockSpec((3, WC, WC), lambda n: (0, 0, 0)),        # tail band
            pl.BlockSpec((1, WC), lambda n: (0, 0)),               # tail bias
        ],
        out_specs=pl.BlockSpec((RB, WC), lambda n: (n, 0)),
        compiler_params=pltpu.CompilerParams(
            dimension_semantics=("parallel",),        # megacore / v7x dual-TC
            vmem_limit_bytes=32 * 1024 * 1024),
    )(x2, wb1, b1, wb2, b2, caw1f, cab1, caw2f, cab2f, wbt, bt)
    return out.reshape(N, H, W, C)


# ---------------------------------------------------------------------------
# Deterministic parameter init (matches PyTorch layer shapes)
# ---------------------------------------------------------------------------
def init_params(key, n_feat, reduction, n_resblocks):
    cr = n_feat // reduction
    params = {"rcabs": []}
    for _ in range(n_resblocks):
        keys = jax.random.split(key, 7)
        key = keys[0]
        blk = {
            "conv1_w": 0.05 * jax.random.normal(keys[1], (3, 3, n_feat, n_feat), jnp.float32),
            "conv1_b": 0.01 * jax.random.normal(keys[2], (n_feat,), jnp.float32),
            "conv2_w": 0.05 * jax.random.normal(keys[3], (3, 3, n_feat, n_feat), jnp.float32),
            "conv2_b": 0.01 * jax.random.normal(keys[4], (n_feat,), jnp.float32),
            "ca_w1": 0.1 * jax.random.normal(keys[5], (n_feat, cr), jnp.float32),
            "ca_b1": jnp.zeros((cr,), jnp.float32),
            "ca_w2": 0.1 * jax.random.normal(keys[6], (cr, n_feat), jnp.float32),
            "ca_b2": jnp.zeros((n_feat,), jnp.float32),
        }
        params["rcabs"].append(blk)
    k1, k2 = jax.random.split(key)
    params["tail_w"] = 0.05 * jax.random.normal(k1, (3, 3, n_feat, n_feat), jnp.float32)
    params["tail_b"] = 0.01 * jax.random.normal(k2, (n_feat,), jnp.float32)
    return params


# ---------------------------------------------------------------------------
# Pure-JAX reference (mirrors the PyTorch semantics) for the correctness check
# ---------------------------------------------------------------------------
def _ref_conv3x3(x, w, b, relu=False):
    y = jax.lax.conv_general_dilated(
        x, w, window_strides=(1, 1), padding="SAME",
        dimension_numbers=("NHWC", "HWIO", "NHWC"))
    y = y + b.reshape(1, 1, 1, -1)
    return jnp.maximum(y, 0.0) if relu else y


def _ref_forward(x, params):
    res = x
    for blk in params["rcabs"]:
        h = _ref_conv3x3(res, blk["conv1_w"], blk["conv1_b"], relu=True)
        h = _ref_conv3x3(h, blk["conv2_w"], blk["conv2_b"], relu=False)
        pooled = jnp.mean(h, axis=(1, 2))                                  # (N, C)
        y = jnp.maximum(pooled @ blk["ca_w1"] + blk["ca_b1"], 0.0)
        y = jax.nn.sigmoid(y @ blk["ca_w2"] + blk["ca_b2"])                # (N, C)
        res = h * y[:, None, None, :] + res
    res = _ref_conv3x3(res, params["tail_w"], params["tail_b"], relu=False)
    return res + x


# ---------------------------------------------------------------------------
if __name__ == "__main__":
    N, H, W = 8, 16, 16
    n_feat, reduction, n_resblocks = 16, 4, 2

    key = jax.random.PRNGKey(0)
    kx, kp = jax.random.split(key)
    x = jax.random.normal(kx, (N, H, W, n_feat), jnp.float32)   # NHWC input
    params = init_params(kp, n_feat, reduction, n_resblocks)

    fwd = jax.jit(residual_group_forward)
    out = jax.block_until_ready(fwd(x, params))

    ref = jax.block_until_ready(_ref_forward(x, params))
    assert out.shape == (N, H, W, n_feat)
    # Conv matmul operands are bf16 (f32 accumulation), so compare with a
    # scale-relative tolerance against the pure-f32 reference.
    err = float(jnp.max(jnp.abs(out - ref)))
    scale = float(jnp.max(jnp.abs(ref)))
    assert err <= 2e-2 * scale, f"Pallas output mismatch: max_err={err}, scale={scale}"

    print("KERNEL_OK")
</pallas_src>

<mosaic_0001>
module attributes {stable_mosaic.version = 11 : i64} {
  func.func @probe(%arg0: memref<8x128xf32, #tpu.memory_space<vmem>>, %arg1: memref<8x128xf32, #tpu.memory_space<vmem>>) attributes {dimension_semantics = [], scalar_prefetch = 0 : i64, scratch_operands = 0 : i64, tpu.core_type = #tpu.core_type<tc>} {
    %c0 = arith.constant 0 : index
    %c0_0 = arith.constant 0 : index
    %0 = vector.load %arg0[%c0, %c0_0] : memref<8x128xf32, #tpu.memory_space<vmem>>, vector<8x128xf32>
    %c1_i32 = arith.constant 1 : i32
    %1 = tpu.dynamic_rotate %0 by %c1_i32 dim 0 : vector<8x128xf32>, i32 -> vector<8x128xf32>
    %c0_1 = arith.constant 0 : index
    %c0_2 = arith.constant 0 : index
    %2 = vector.load %arg1[%c0_1, %c0_2] : memref<8x128xf32, #tpu.memory_space<vmem>>, vector<8x128xf32>
    tpu.vector_store %arg1[%c0_1, %c0_2], %1 {strides = array<i32>} : memref<8x128xf32, #tpu.memory_space<vmem>>, vector<8x128xf32>,
    return
  }
}

</mosaic_0001>

<llo_original>
// kernel: tpu_custom_call.1
$region0: #{tpu_custom_call.1}
  #allocation0 [shape = 'u32[]', space=smem, size = 0x4, offset = 0x4, fixed_abs, tag = 'smem constant byte address 0x4 - core index']
  #allocation1 [shape = 'u32[144,128]{1,0:T(1,128)}', space=vmem, size = 0x12000, scoped, tag = 'internal scratch']
  %s0 = inlined_call_operand.hbm [shape: f32[8,128], index: 0, kind: input, shape index: {}]
  %s1 = inlined_call_operand.hbm [shape: f32[8,128], index: 1, kind: output, shape index: {}]
  %s2 = sld [smem:[#allocation0]]
  $region18: #{tpu_custom_call.1} parent=0
    _
  %s4 = ssub.s32 1, %s2
  %s5 = scalar_select 0, %s4, %s2
  $region1: #{tpu_custom_call.1} parent=0
    #allocation2 [shape = 'u8[4096]{0}', space=vmem, size = 0x1000, scoped, tag = 'input window, operand 0, single buffered']
    #allocation3 [shape = 's32[1]{0}', space=sflag, size = 0x4, scoped, tag = 'scoped memory for tpu_custom_call.1']
    #allocation4 [shape = 's32[1]{0}', space=sflag, size = 0x4, scoped, tag = 'scoped memory for tpu_custom_call.1']
    #allocation5 [shape = 'u8[4096]{0}', space=vmem, size = 0x1000, scoped, tag = 'output window, operand 0, single buffered']
    %6 = vsyncpa [#allocation3], 0
    %7 = vsyncpa [#allocation4], 0
    // Predicated region
    $region2: #{tpu_custom_call.1} parent=1 // pred_check
      _
    $region3: #{tpu_custom_call.1} parent=1 // pred_check_branch
      %9 = sbr.rel (0) target = $region5
    $region4: #{tpu_custom_call.1} parent=1 // pred_region
      %s11 = ssub.s32 128, 128
      %12 = vsyncadd [#allocation3], %s11
      %s14 = sshll.u32 [#allocation2], 4
      %s15 = int_to_ptr.vmem [resolvable:$true] %s14
      %17 = dma.hbm_to_vmem [thread:$0]  %s0, 128, %s15, [#allocation3]
    $region5: #{tpu_custom_call.1} parent=1 // pred_fallthru
      _
    // Predicated region
    $region6: #{tpu_custom_call.1} parent=1 // pred_check
      _
    $region7: #{tpu_custom_call.1} parent=1 // pred_check_branch
      %19 = sbr.rel (0) target = $region9
    $region8: #{tpu_custom_call.1} parent=1 // pred_region
      %20 = dma.done [#allocation3], 128
    $region9: #{tpu_custom_call.1} parent=1 // pred_fallthru
      _
    %v21 = vld [vmem:[#allocation2] sm:$0xff]
    %v22 = vrot.slane %v21, 7
    %23 = vst [vmem:[#allocation5] sm:$0xff] %v22
    // Predicated region
    $region10: #{tpu_custom_call.1} parent=1 // pred_check
      _
    $region11: #{tpu_custom_call.1} parent=1 // pred_check_branch
      %25 = sbr.rel (0) target = $region13
    $region12: #{tpu_custom_call.1} parent=1 // pred_region
      %s27 = ssub.s32 128, 128
      %28 = vsyncadd [#allocation4], %s27
      %s30 = sshll.u32 [#allocation5], 4
      %s31 = int_to_ptr.vmem [resolvable:$true] %s30
      %33 = dma.vmem_to_hbm [thread:$0]  %s31, 128, %s1, [#allocation4]
    $region13: #{tpu_custom_call.1} parent=1 // pred_fallthru
      _
    // Predicated region
    $region14: #{tpu_custom_call.1} parent=1 // pred_check
      _
    $region15: #{tpu_custom_call.1} parent=1 // pred_check_branch
      %35 = sbr.rel (0) target = $region17
    $region16: #{tpu_custom_call.1} parent=1 // pred_region
      %36 = dma.done [#allocation4], 128
    $region17: #{tpu_custom_call.1} parent=1 // pred_fallthru
      _
    %37 = vsyncpa [#allocation3], 1
    %38 = vsyncpa [#allocation4], 1

</llo_original>
